<compile_context>
chip_gen: v7x
topology: tpu7x:2x2x1
jax: 0.10.0
libtpu: 0.0.40
codegen_flags: <defaults>
</compile_context>

<pallas_src>
import functools

import jax
import jax.numpy as jnp
from jax.experimental import pallas as pl
from jax.experimental.pallas import tpu as pltpu


_SQRT_2_OVER_PI = 0.7978845608028654
_GELU_CUBIC = 0.044715


def _gelu_new(x):
    # HF "gelu_new" / NewGELUActivation (tanh approximation) used by Phi configs.
    return 0.5 * x * (1.0 + jnp.tanh(_SQRT_2_OVER_PI * (x + _GELU_CUBIC * (x * x * x))))


# ----------------------------------------------------------------------------
# Kernels
# ----------------------------------------------------------------------------

def _phi_mlp_kernel_f32_out(x_ref, w1_ref, b1_ref, w2_ref, b2_ref, o_ref):
    """f32 output: accumulate directly into the resident output tile (no scratch)."""
    k = pl.program_id(1)

    # fc1 slice: (tm, d_model) @ (d_model, tf), f32 accumulation on the MXU.
    h = jnp.dot(x_ref[...], w1_ref[...], preferred_element_type=jnp.float32)
    h = _gelu_new(h + b1_ref[...])                      # bias + activation in f32

    # fc2 partial: (tm, tf) @ (tf, d_model).
    part = jnp.dot(h.astype(w2_ref.dtype), w2_ref[...],
                   preferred_element_type=jnp.float32)

    @pl.when(k == 0)
    def _():
        o_ref[...] = part + b2_ref[...]

    @pl.when(k > 0)
    def _():
        o_ref[...] = o_ref[...] + part


def _phi_mlp_kernel_acc(x_ref, w1_ref, b1_ref, w2_ref, b2_ref, o_ref, acc_ref):
    """Non-f32 output: f32 VMEM accumulator, cast once on the last d_ff step."""
    k = pl.program_id(1)

    h = jnp.dot(x_ref[...], w1_ref[...], preferred_element_type=jnp.float32)
    h = _gelu_new(h + b1_ref[...])
    part = jnp.dot(h.astype(w2_ref.dtype), w2_ref[...],
                   preferred_element_type=jnp.float32)

    @pl.when(k == 0)
    def _():
        acc_ref[...] = part                              # no zero-init + "+="

    @pl.when(k > 0)
    def _():
        acc_ref[...] += part

    @pl.when(k == pl.num_programs(1) - 1)
    def _():
        o_ref[...] = (acc_ref[...] + b2_ref[...]).astype(o_ref.dtype)


# ----------------------------------------------------------------------------
# Helpers
# ----------------------------------------------------------------------------

def _round_up(n, m):
    return ((n + m - 1) // m) * m


def _tpu_generation_info():
    """Return (tensorcores sharing the 'parallel' axis, physical VMEM bytes).

    Conservative defaults (1 TC, 64 MiB) if the device kind is unknown.
    """
    try:
        kind = (jax.devices()[0].device_kind or "").lower()
    except Exception:
        kind = ""
    if "v7" in kind:
        return 2, 64 << 20          # 2 TCs/chip, 64 MiB VMEM per TC
    if "v6" in kind:
        return 1, 128 << 20
    if "v5e" in kind or "v5 lite" in kind or "v5litepod" in kind:
        return 1, 128 << 20
    if "v5" in kind or "v4" in kind:
        return 2, 128 << 20         # v5p / v4 megacore
    return 1, 64 << 20


def _vmem_estimate(tm, tff, d_model, isz_c, isz_o, f32_out):
    """Honest per-step VMEM footprint: double-buffered blocks + live intermediates."""
    blocks = 2 * (tm * d_model * isz_c        # x tile
                  + d_model * tff * isz_c     # W1 slab
                  + tff * 4                   # b1 slab (f32)
                  + tff * d_model * isz_c     # W2 slab
                  + d_model * 4               # b2 (f32)
                  + tm * d_model * isz_o)     # output tile
    interm = tm * tff * (4 + isz_c)           # h in f32 + compute-dtype copy for the MXU
    acc = 0 if f32_out else tm * d_model * 4  # f32 accumulator only for non-f32 outputs
    return blocks + interm + acc


# ----------------------------------------------------------------------------
# Wrapper
# ----------------------------------------------------------------------------

@functools.partial(jax.jit, static_argnames=("tm", "tf", "compute_dtype"))
def phi_mlp(hidden_states, w1_t, b1, w2_t, b2, *, tm=None, tf=None,
            compute_dtype=jnp.bfloat16):
    """hidden_states: (..., d_model). Returns same shape/dtype."""
    orig_shape = hidden_states.shape
    out_dtype = hidden_states.dtype
    d_model = orig_shape[-1]
    d_ff = w1_t.shape[1]

    num_tc, vmem_cap = _tpu_generation_info()
    small_vmem = vmem_cap <= (64 << 20)
    # Leave headroom for Mosaic internal scratch: ~56 MiB on 64 MiB chips,
    # ~112 MiB on 128 MiB chips (no more hard 64 MiB clamp on v5e/v6e).
    vmem_budget = (56 << 20) if small_vmem else (112 << 20)

    if tm is None:
        tm = 512 if small_vmem else 1024
    if tf is None:
        tf = 1024

    x = hidden_states.reshape(-1, d_model)
    n_tok = x.shape[0]

    # --- token tiling: 16-row granularity (bf16 sublane packing); split into at
    #     least `num_tc` tiles so dual-TC chips get work on the parallel axis.
    tm_cap = _round_up(pl.cdiv(n_tok, num_tc), 16)
    tm_eff = min(tm, tm_cap)

    # --- d_ff tiling: pad d_ff to a multiple of the tile instead of falling back
    #     to an un-tiled full-weight block (padding contributes exactly 0).
    if d_ff <= tf:
        tf_eff = d_ff
    else:
        tf_eff = max(128, (tf // 128) * 128)
    d_ff_pad = _round_up(d_ff, tf_eff)

    isz_c = jnp.dtype(compute_dtype).itemsize
    isz_o = jnp.dtype(out_dtype).itemsize
    f32_out = out_dtype == jnp.float32

    def est(tm_, tf_):
        return int(_vmem_estimate(tm_, tf_, d_model, isz_c, isz_o, f32_out) * 1.25) \
            + (4 << 20)

    # Shrink tiles (tokens first, then d_ff) if the estimate busts the budget.
    while est(tm_eff, tf_eff) > vmem_budget and tm_eff > 128:
        tm_eff = _round_up(tm_eff // 2, 16)
    while est(tm_eff, tf_eff) > vmem_budget and tf_eff > 512:
        tf_eff = max(512, (tf_eff // 2 // 128) * 128)
        d_ff_pad = _round_up(d_ff, tf_eff)

    # --- padding (tokens + d_ff). gelu(0 + 0) = 0 and padded W2 rows are 0,
    #     so padded d_ff columns contribute exactly 0 to the output.
    n_pad = _round_up(n_tok, tm_eff)
    if n_pad != n_tok:
        x = jnp.pad(x, ((0, n_pad - n_tok), (0, 0)))
    if d_ff_pad != d_ff:
        w1_t = jnp.pad(w1_t, ((0, 0), (0, d_ff_pad - d_ff)))
        b1 = jnp.pad(b1, ((0, d_ff_pad - d_ff),))
        w2_t = jnp.pad(w2_t, ((0, d_ff_pad - d_ff), (0, 0)))

    kt = d_ff_pad // tf_eff
    n_tiles = n_pad // tm_eff

    # bf16 (or chosen compute dtype) for the MXU; biases stay f32.
    x_c = x.astype(compute_dtype)
    w1_c = w1_t.astype(compute_dtype)
    w2_c = w2_t.astype(compute_dtype)
    b1_2d = b1.reshape(1, d_ff_pad).astype(jnp.float32)
    b2_2d = b2.reshape(1, d_model).astype(jnp.float32)

    vmem_limit = min(max(est(tm_eff, tf_eff), 32 << 20), vmem_budget)

    # Weight slabs are re-streamed once per token tile: count that traffic.
    cost = pl.CostEstimate(
        flops=4 * n_pad * d_model * d_ff_pad,           # two matmuls: 2*M*N*K each
        transcendentals=n_pad * d_ff_pad,               # tanh in gelu_new
        bytes_accessed=(x_c.size * isz_c
                        + n_tiles * (w1_c.size + w2_c.size) * isz_c
                        + n_tiles * (b1_2d.size + b2_2d.size) * 4
                        + n_pad * d_model * isz_o),
    )

    in_specs = [
        pl.BlockSpec((tm_eff, d_model), lambda i, k: (i, 0)),   # x tile
        pl.BlockSpec((d_model, tf_eff), lambda i, k: (0, k)),   # W1^T slab
        pl.BlockSpec((1, tf_eff), lambda i, k: (0, k)),         # b1 slab
        pl.BlockSpec((tf_eff, d_model), lambda i, k: (k, 0)),   # W2^T slab
        pl.BlockSpec((1, d_model), lambda i, k: (0, 0)),        # b2
    ]
    out_spec = pl.BlockSpec((tm_eff, d_model), lambda i, k: (i, 0))

    if f32_out:
        kernel = _phi_mlp_kernel_f32_out
        scratch = []
    else:
        kernel = _phi_mlp_kernel_acc
        scratch = [pltpu.VMEM((tm_eff, d_model), jnp.float32)]

    out = pl.pallas_call(
        kernel,
        out_shape=jax.ShapeDtypeStruct((n_pad, d_model), out_dtype),
        grid_spec=pltpu.PrefetchScalarGridSpec(
            num_scalar_prefetch=0,
            grid=(n_tiles, kt),                         # reduction (d_ff) axis last
            in_specs=in_specs,
            out_specs=out_spec,
            scratch_shapes=scratch,
        ),
        compiler_params=pltpu.CompilerParams(
            dimension_semantics=("parallel", "arbitrary"),
            vmem_limit_bytes=vmem_limit,
        ),
        cost_estimate=cost,
    )(x_c, w1_c, b1_2d, w2_c, b2_2d)

    return out[:n_tok].reshape(orig_shape)


# ----------------------------------------------------------------------------
# Params / reference / test
# ----------------------------------------------------------------------------

def init_params(key, d_model, d_ff, dtype=jnp.float32):
    """Synthetic init mimicking nn.Linear shapes.
    fc1.weight: (d_ff, d_model), fc1.bias: (d_ff,)
    fc2.weight: (d_model, d_ff), fc2.bias: (d_model,)
    Weights are returned already transposed to (in, out)."""
    k1, k2, k3, k4 = jax.random.split(key, 4)
    lim1 = 1.0 / jnp.sqrt(d_model)
    lim2 = 1.0 / jnp.sqrt(d_ff)
    w1 = jax.random.uniform(k1, (d_ff, d_model), dtype, -lim1, lim1)
    b1 = jax.random.uniform(k2, (d_ff,), dtype, -lim1, lim1)
    w2 = jax.random.uniform(k3, (d_model, d_ff), dtype, -lim2, lim2)
    b2 = jax.random.uniform(k4, (d_model,), dtype, -lim2, lim2)
    return w1.T, b1, w2.T, b2


def _reference(x, w1_t, b1, w2_t, b2, compute_dtype=jnp.bfloat16):
    """Pure-JAX reference mirroring the kernel's bf16/f32 mixed precision."""
    orig_shape = x.shape
    d_model = orig_shape[-1]
    xf = x.reshape(-1, d_model).astype(compute_dtype)
    h = jnp.dot(xf, w1_t.astype(compute_dtype),
                preferred_element_type=jnp.float32) + b1.astype(jnp.float32)
    h = _gelu_new(h)
    o = jnp.dot(h.astype(compute_dtype), w2_t.astype(compute_dtype),
                preferred_element_type=jnp.float32) + b2.astype(jnp.float32)
    return o.astype(x.dtype).reshape(orig_shape)


if __name__ == "__main__":
    key = jax.random.PRNGKey(0)
    kx, kp, kx2, kp2, kx3 = jax.random.split(key, 5)

    # Small config: batch=2, seq=8, d_model=32, intermediate_size=64 (f32 path).
    batch, seq, d_model, d_ff = 2, 8, 32, 64
    x = jax.random.normal(kx, (batch, seq, d_model), jnp.float32)
    w1_t, b1, w2_t, b2 = init_params(kp, d_model, d_ff)

    y = jax.block_until_ready(phi_mlp(x, w1_t, b1, w2_t, b2))
    ref = _reference(x, w1_t, b1, w2_t, b2)
    assert y.shape == x.shape and y.dtype == x.dtype
    assert jnp.allclose(y, ref, atol=2e-2, rtol=2e-2)

    # Ragged token count (padding path: 3*5 = 15 tokens).
    x2 = jax.random.normal(kx2, (3, 5, d_model), jnp.float32)
    y2 = jax.block_until_ready(phi_mlp(x2, w1_t, b1, w2_t, b2))
    ref2 = _reference(x2, w1_t, b1, w2_t, b2)
    assert y2.shape == x2.shape
    assert jnp.allclose(y2, ref2, atol=2e-2, rtol=2e-2)

    # Exercise the d_ff padding + multi-step reduction path and the bf16-output
    # (scratch accumulator) kernel: d_ff=192 with tf=128 -> d_ff padded to 256, kt=2.
    d_ff3 = 192
    w1b, b1b, w2b, b2b = init_params(kp2, d_model, d_ff3)
    x3 = jax.random.normal(kx3, (2, 16, d_model), jnp.float32).astype(jnp.bfloat16)
    y3 = jax.block_until_ready(phi_mlp(x3, w1b, b1b, w2b, b2b, tf=128))
    ref3 = _reference(x3, w1b, b1b, w2b, b2b)
    assert y3.shape == x3.shape and y3.dtype == x3.dtype
    assert jnp.allclose(y3.astype(jnp.float32), ref3.astype(jnp.float32),
                        atol=5e-2, rtol=5e-2)

    print("KERNEL_OK")
</pallas_src>

<mosaic_0001>
module attributes {stable_mosaic.version = 11 : i64} {
  func.func @_phi_mlp_kernel_f32_out(%arg0: i32, %arg1: i32, %arg2: memref<16x32xbf16, #tpu.memory_space<vmem>>, %arg3: memref<32x64xbf16, #tpu.memory_space<vmem>>, %arg4: memref<1x64xf32, #tpu.memory_space<vmem>>, %arg5: memref<64x32xbf16, #tpu.memory_space<vmem>>, %arg6: memref<1x32xf32, #tpu.memory_space<vmem>>, %arg7: memref<16x32xf32, #tpu.memory_space<vmem>>) attributes {dimension_semantics = [#tpu.dimension_semantics<parallel>, #tpu.dimension_semantics<arbitrary>], iteration_bounds = array<i64: 1, 1>, scalar_prefetch = 0 : i64, scratch_operands = 0 : i64, tpu.core_type = #tpu.core_type<tc>, window_params = [{transform_indices = @transform_0, window_bounds = array<i64: 16, 32>}, {transform_indices = @transform_1, window_bounds = array<i64: 32, 64>}, {transform_indices = @transform_2, window_bounds = array<i64: 1, 64>}, {transform_indices = @transform_3, window_bounds = array<i64: 64, 32>}, {pipeline_mode = #tpu.pipeline_mode<synchronous>, transform_indices = @transform_4, window_bounds = array<i64: 1, 32>}, {transform_indices = @transform_5, window_bounds = array<i64: 16, 32>}]} {
    %c0 = arith.constant 0 : index
    %c0_0 = arith.constant 0 : index
    %0 = vector.load %arg2[%c0, %c0_0] : memref<16x32xbf16, #tpu.memory_space<vmem>>, vector<16x32xbf16>
    %c0_1 = arith.constant 0 : index
    %c0_2 = arith.constant 0 : index
    %1 = vector.load %arg3[%c0_1, %c0_2] : memref<32x64xbf16, #tpu.memory_space<vmem>>, vector<32x64xbf16>
    %cst = arith.constant dense<0.000000e+00> : vector<16x64xf32>
    %2 = tpu.matmul %0, %1, %cst {dimension_numbers = #tpu.dot_dimension_numbers<[1], [0], [0], [1], [0, 0, 1, 1], [], []>} : vector<16x32xbf16>, vector<32x64xbf16>, vector<16x64xf32> -> vector<16x64xf32>
    %c0_3 = arith.constant 0 : index
    %c0_4 = arith.constant 0 : index
    %3 = vector.load %arg4[%c0_3, %c0_4] : memref<1x64xf32, #tpu.memory_space<vmem>>, vector<1x64xf32>
    %4 = vector.broadcast %3 : vector<1x64xf32> to vector<16x64xf32>
    %5 = arith.addf %2, %4 : vector<16x64xf32>
    %cst_5 = arith.constant 5.000000e-01 : f32
    %6 = vector.broadcast %cst_5 : f32 to vector<16x64xf32>
    %7 = arith.mulf %6, %5 : vector<16x64xf32>
    %8 = arith.mulf %5, %5 : vector<16x64xf32>
    %9 = arith.mulf %8, %5 : vector<16x64xf32>
    %cst_6 = arith.constant 4.471500e-02 : f32
    %10 = vector.broadcast %cst_6 : f32 to vector<16x64xf32>
    %11 = arith.mulf %10, %9 : vector<16x64xf32>
    %12 = arith.addf %5, %11 : vector<16x64xf32>
    %cst_7 = arith.constant 0.797884583 : f32
    %13 = vector.broadcast %cst_7 : f32 to vector<16x64xf32>
    %14 = arith.mulf %13, %12 : vector<16x64xf32>
    %15 = math.tanh %14 : vector<16x64xf32>
    %cst_8 = arith.constant 1.000000e+00 : f32
    %16 = vector.broadcast %cst_8 : f32 to vector<16x64xf32>
    %17 = arith.addf %16, %15 : vector<16x64xf32>
    %18 = arith.mulf %7, %17 : vector<16x64xf32>
    %19 = arith.truncf %18 : vector<16x64xf32> to vector<16x64xbf16>
    %c0_9 = arith.constant 0 : index
    %c0_10 = arith.constant 0 : index
    %20 = vector.load %arg5[%c0_9, %c0_10] : memref<64x32xbf16, #tpu.memory_space<vmem>>, vector<64x32xbf16>
    %cst_11 = arith.constant dense<0.000000e+00> : vector<16x32xf32>
    %21 = tpu.matmul %19, %20, %cst_11 {dimension_numbers = #tpu.dot_dimension_numbers<[1], [0], [0], [1], [0, 0, 1, 1], [], []>} : vector<16x64xbf16>, vector<64x32xbf16>, vector<16x32xf32> -> vector<16x32xf32>
    %c0_i32 = arith.constant 0 : i32
    %22 = arith.cmpi eq, %arg1, %c0_i32 : i32
    %23 = arith.extui %22 : i1 to i32
    %c0_i32_12 = arith.constant 0 : i32
    %24 = arith.cmpi ne, %23, %c0_i32_12 : i32
    scf.if %24 {
      %c0_15 = arith.constant 0 : index
      %c0_16 = arith.constant 0 : index
      %28 = vector.load %arg6[%c0_15, %c0_16] : memref<1x32xf32, #tpu.memory_space<vmem>>, vector<1x32xf32>
      %29 = vector.broadcast %28 : vector<1x32xf32> to vector<16x32xf32>
      %30 = arith.addf %21, %29 : vector<16x32xf32>
      %c0_17 = arith.constant 0 : index
      %c0_18 = arith.constant 0 : index
      %31 = vector.load %arg7[%c0_17, %c0_18] : memref<16x32xf32, #tpu.memory_space<vmem>>, vector<16x32xf32>
      tpu.vector_store %arg7[%c0_17, %c0_18], %30 {strides = array<i32>} : memref<16x32xf32, #tpu.memory_space<vmem>>, vector<16x32xf32>,
    } else {
    }
    %c0_i32_13 = arith.constant 0 : i32
    %25 = arith.cmpi sgt, %arg1, %c0_i32_13 : i32
    %26 = arith.extui %25 : i1 to i32
    %c0_i32_14 = arith.constant 0 : i32
    %27 = arith.cmpi ne, %26, %c0_i32_14 : i32
    scf.if %27 {
      %c0_15 = arith.constant 0 : index
      %c0_16 = arith.constant 0 : index
      %28 = vector.load %arg7[%c0_15, %c0_16] : memref<16x32xf32, #tpu.memory_space<vmem>>, vector<16x32xf32>
      %29 = arith.addf %28, %21 : vector<16x32xf32>
      %c0_17 = arith.constant 0 : index
      %c0_18 = arith.constant 0 : index
      %30 = vector.load %arg7[%c0_17, %c0_18] : memref<16x32xf32, #tpu.memory_space<vmem>>, vector<16x32xf32>
      tpu.vector_store %arg7[%c0_17, %c0_18], %29 {strides = array<i32>} : memref<16x32xf32, #tpu.memory_space<vmem>>, vector<16x32xf32>,
    } else {
    }
    return
  }
  func.func @transform_0(%arg0: i32, %arg1: i32) -> (i32, i32) {
    %c0_i32 = arith.constant 0 : i32
    %c0_i32_0 = arith.constant 0 : i32
    return %arg0, %c0_i32 : i32, i32
  }
  func.func @transform_1(%arg0: i32, %arg1: i32) -> (i32, i32) {
    %c0_i32 = arith.constant 0 : i32
    %c0_i32_0 = arith.constant 0 : i32
    return %c0_i32, %arg1 : i32, i32
  }
  func.func @transform_2(%arg0: i32, %arg1: i32) -> (i32, i32) {
    %c0_i32 = arith.constant 0 : i32
    %c0_i32_0 = arith.constant 0 : i32
    return %c0_i32, %arg1 : i32, i32
  }
  func.func @transform_3(%arg0: i32, %arg1: i32) -> (i32, i32) {
    %c0_i32 = arith.constant 0 : i32
    %c0_i32_0 = arith.constant 0 : i32
    return %arg1, %c0_i32 : i32, i32
  }
  func.func @transform_4(%arg0: i32, %arg1: i32) -> (i32, i32) {
    %c0_i32 = arith.constant 0 : i32
    %c0_i32_0 = arith.constant 0 : i32
    %c0_i32_1 = arith.constant 0 : i32
    return %c0_i32, %c0_i32_0 : i32, i32
  }
  func.func @transform_5(%arg0: i32, %arg1: i32) -> (i32, i32) {
    %c0_i32 = arith.constant 0 : i32
    %c0_i32_0 = arith.constant 0 : i32
    return %arg0, %c0_i32 : i32, i32
  }
}

</mosaic_0001>

<llo_original>
// kernel: phi_mlp.1
$region0: #{phi_mlp.1}
  #allocation0 [shape = 'u32[]', space=smem, size = 0x4, offset = 0x4, fixed_abs, tag = 'smem constant byte address 0x4 - core index']
  #allocation1 [shape = 'u32[144,128]{1,0:T(1,128)}', space=vmem, size = 0x12000, scoped, tag = 'internal scratch']
  %s0 = inlined_call_operand.vmem [shape: bf16[16,32], index: 0, kind: input, shape index: {}]
  %s1 = inlined_call_operand.vmem [shape: bf16[32,64], index: 1, kind: input, shape index: {}]
  %s2 = inlined_call_operand.vmem [shape: f32[1,64], index: 2, kind: input, shape index: {}]
  %s3 = inlined_call_operand.vmem [shape: bf16[64,32], index: 3, kind: input, shape index: {}]
  %s4 = inlined_call_operand.vmem [shape: f32[1,32], index: 4, kind: input, shape index: {}]
  %s5 = inlined_call_operand.hbm [shape: f32[16,32], index: 5, kind: output, shape index: {}]
  %s6 = sld [smem:[#allocation0]]
  $region38: #{phi_mlp.1} parent=0
    _
  %s8 = ssub.s32 1, %s6
  %s9 = scalar_select 0, %s8, %s6
  $region1: #{phi_mlp.1} parent=0
    #allocation2 [shape = 'u8[8192]{0}', space=vmem, size = 0x2000, scoped, tag = 'output window, operand 0, single buffered']
    #allocation3 [shape = 's32[1]{0}', space=sflag, size = 0x4, scoped, tag = 'scoped memory for phi_mlp.1']
    %10 = vsyncpa [#allocation3], 0
    // Predicated region
    $region2: #{phi_mlp.1} parent=1 // pred_check
      _
    $region3: #{phi_mlp.1} parent=1 // pred_check_branch
      %12 = sbr.rel (0) target = $region5
    $region4: #{phi_mlp.1} parent=1 // pred_region
      _
    $region5: #{phi_mlp.1} parent=1 // pred_fallthru
      _
    // Predicated region
    $region6: #{phi_mlp.1} parent=1 // pred_check
      _
    $region7: #{phi_mlp.1} parent=1 // pred_check_branch
      %14 = sbr.rel (0) target = $region9
    $region8: #{phi_mlp.1} parent=1 // pred_region
      _
    $region9: #{phi_mlp.1} parent=1 // pred_fallthru
      _
    // Predicated region
    $region10: #{phi_mlp.1} parent=1 // pred_check
      _
    $region11: #{phi_mlp.1} parent=1 // pred_check_branch
      %16 = sbr.rel (0) target = $region13
    $region12: #{phi_mlp.1} parent=1 // pred_region
      _
    $region13: #{phi_mlp.1} parent=1 // pred_fallthru
      _
    // Predicated region
    $region14: #{phi_mlp.1} parent=1 // pred_check
      _
    $region15: #{phi_mlp.1} parent=1 // pred_check_branch
      %18 = sbr.rel (0) target = $region17
    $region16: #{phi_mlp.1} parent=1 // pred_region
      _
    $region17: #{phi_mlp.1} parent=1 // pred_fallthru
      _
    // Predicated region
    $region18: #{phi_mlp.1} parent=1 // pred_check
      _
    $region19: #{phi_mlp.1} parent=1 // pred_check_branch
      %20 = sbr.rel (0) target = $region21
    $region20: #{phi_mlp.1} parent=1 // pred_region
      _
    $region21: #{phi_mlp.1} parent=1 // pred_fallthru
      _
    %v22 = vld [vmem:[%s0] sm:$0xf]
    %v23 = vld [vmem:[%s0 + $0x4] sm:$0xf]
    %v24 = vld [vmem:[%s1] sm:$0xf]
    %v25 = vld [vmem:[%s1 + $0x4] sm:$0xf]
    %v26 = vld [vmem:[%s1 + $0x8] sm:$0xf]
    %v27 = vld [vmem:[%s1 + $0xc] sm:$0xf]
    %v28 = vld [vmem:[%s2] sm:$0x1]
    %v30 = vlaneseq
    %v31 = vshrl.u32 %v30, 7
    %v32 = vsub.s32 0, %v31
    %v33 = vrot.slane %v28, %v32
    %v37 = vunpack.c.l.b16 %v22
    %v38 = vunpack.c.l.b16 %v23
    %v39 = vpack.c.b16 %v38, %v37
    %v44 = vunpack.c.l.b16 %v24
    %v45 = vunpack.c.l.b16 %v25
    %v46 = vunpack.c.l.b16 %v26
    %v47 = vunpack.c.l.b16 %v27
    %v48 = vpack.c.b16 %v45, %v44
    %v49 = vpack.c.b16 %v47, %v46
    %vm52 = vcmask 261120
    %v54 = vsel %vm52, %v39, 0
    %56 = vmatprep.subr.bf16.mxu0 0
    %57 = vmatpush1.bf16.msra.mxu0 %v48
    %58 = vmatprep.subr.bf16.mxu0 0
    %59 = vmatpush1.bf16.msra.mxu0 %v49
    %60 = vmatprep.subr.bf16.mxu0 0
    %61 = vmatpush1.bf16.msra.mxu0 0
    %62 = vmatprep.subr.bf16.mxu0 0
    %63 = vmatpush1.bf16.msra.mxu0 0
    %64 = vmatprep.subr.bf16.mxu0 0
    %65 = vmatpush1.bf16.msra.mxu0 0
    %66 = vmatprep.subr.bf16.mxu0 0
    %67 = vmatpush1.bf16.msra.mxu0 0
    %68 = vmatprep.subr.bf16.mxu0 0
    %69 = vmatpush1.bf16.msra.mxu0 0
    %70 = vmatprep.subr.bf16.mxu0 0
    %71 = vmatpush1.bf16.msra.mxu0 0
    %72 = vmatprep.subr.bf16.mxu0 0
    %73 = vmatpush1.bf16.msra.mxu0 0
    %74 = vmatprep.subr.bf16.mxu0 0
    %75 = vmatpush1.bf16.msra.mxu0 0
    %76 = vmatprep.subr.bf16.mxu0 0
    %77 = vmatpush1.bf16.msra.mxu0 0
    %78 = vmatprep.subr.bf16.mxu0 0
    %79 = vmatpush1.bf16.msra.mxu0 0
    %80 = vmatprep.subr.bf16.mxu0 0
    %81 = vmatpush1.bf16.msra.mxu0 0
    %82 = vmatprep.subr.bf16.mxu0 0
    %83 = vmatpush1.bf16.msra.mxu0 0
    %84 = vmatprep.subr.bf16.mxu0 0
    %85 = vmatpush1.bf16.msra.mxu0 0
    %86 = vmatprep.subr.bf16.mxu0 0
    %87 = vmatpush1.bf16.msra.mxu0 0
    %88 = vmatprep.mubr.bf16.mxu0 0
    %89 = vmatmul.mubr.bf16.gmra.mrb[0].mxu0 %v54
    %v90 = vpop.f32.mrb[0].mxu0
    %v91 = vadd.f32 %v33, %v90
    %v92 = vpop.f32.mrb[0].mxu0
    %v93 = vpop.f32.mrb[0].mxu0
    %v94 = vadd.f32 %v33, %v93
    %v95 = vpop.f32.mrb[0].mxu0
    %96 = vdwg.mxu0
    %v97 = vmul.f32 %v91, 0.5
    %v98 = vmul.f32 %v94, 0.5
    %v99 = vmul.f32 %v91, %v91
    %v100 = vmul.f32 %v94, %v94
    %v101 = vmul.f32 %v99, %v91
    %v102 = vmul.f32 %v100, %v94
    %v103 = vmul.f32 %v101, 0.044715
    %v104 = vmul.f32 %v102, 0.044715
    %v105 = vadd.f32 %v91, %v103
    %v106 = vadd.f32 %v94, %v104
    %v107 = vmul.f32 %v105, 0.7978846
    %v108 = vmul.f32 %v106, 0.7978846
    %v109 = vtanh.pop %v107
    %v110 = vtanh.pop %v108
    %v111 = vadd.f32 %v109, 1.0
    %v112 = vadd.f32 %v110, 1.0
    %v113 = vmul.f32 %v97, %v111
    %v114 = vmul.f32 %v98, %v112
    %v115 = vpack.c.bf16 %v114, %v113
    %v116 = vld [vmem:[%s3] sm:$0xf]
    %v117 = vld [vmem:[%s3 + $0x4] sm:$0xf]
    %v118 = vld [vmem:[%s3 + $0x8] sm:$0xf]
    %v119 = vld [vmem:[%s3 + $0xc] sm:$0xf]
    %v120 = vld [vmem:[%s3 + $0x10] sm:$0xf]
    %v121 = vld [vmem:[%s3 + $0x14] sm:$0xf]
    %v122 = vld [vmem:[%s3 + $0x18] sm:$0xf]
    %v123 = vld [vmem:[%s3 + $0x1c] sm:$0xf]
    %v132 = vunpack.c.l.b16 %v116
    %v133 = vunpack.c.l.b16 %v117
    %v134 = vunpack.c.l.b16 %v118
    %v135 = vunpack.c.l.b16 %v119
    %v136 = vunpack.c.l.b16 %v120
    %v137 = vunpack.c.l.b16 %v121
    %v138 = vunpack.c.l.b16 %v122
    %v139 = vunpack.c.l.b16 %v123
    %v140 = vpack.c.b16 %v133, %v132
    %v141 = vpack.c.b16 %v135, %v134
    %v142 = vpack.c.b16 %v137, %v136
    %v143 = vpack.c.b16 %v139, %v138
    %vm148 = vcmask 523264
    %v150 = vsel %vm148, %v115, 0
    %152 = vmatprep.subr.bf16.mxu0 0
    %153 = vmatpush1.bf16.msra.mxu0 %v140
    %154 = vmatprep.subr.bf16.mxu0 0
    %155 = vmatpush1.bf16.msra.mxu0 %v141
    %156 = vmatprep.subr.bf16.mxu0 0
    %157 = vmatpush1.bf16.msra.mxu0 %v142
    %158 = vmatprep.subr.bf16.mxu0 0
    %159 = vmatpush1.bf16.msra.mxu0 %v143
    %160 = vmatprep.subr.bf16.mxu0 0
    %161 = vmatpush1.bf16.msra.mxu0 0
    %162 = vmatprep.subr.bf16.mxu0 0
    %163 = vmatpush1.bf16.msra.mxu0 0
    %164 = vmatprep.subr.bf16.mxu0 0
    %165 = vmatpush1.bf16.msra.mxu0 0
    %166 = vmatprep.subr.bf16.mxu0 0
    %167 = vmatpush1.bf16.msra.mxu0 0
    %168 = vmatprep.subr.bf16.mxu0 0
    %169 = vmatpush1.bf16.msra.mxu0 0
    %170 = vmatprep.subr.bf16.mxu0 0
    %171 = vmatpush1.bf16.msra.mxu0 0
    %172 = vmatprep.subr.bf16.mxu0 0
    %173 = vmatpush1.bf16.msra.mxu0 0
    %174 = vmatprep.subr.bf16.mxu0 0
    %175 = vmatpush1.bf16.msra.mxu0 0
    %176 = vmatprep.subr.bf16.mxu0 0
    %177 = vmatpush1.bf16.msra.mxu0 0
    %178 = vmatprep.subr.bf16.mxu0 0
    %179 = vmatpush1.bf16.msra.mxu0 0
    %180 = vmatprep.subr.bf16.mxu0 0
    %181 = vmatpush1.bf16.msra.mxu0 0
    %182 = vmatprep.subr.bf16.mxu0 0
    %183 = vmatpush1.bf16.msra.mxu0 0
    %184 = vmatprep.mubr.bf16.mxu0 0
    %185 = vmatmul.mubr.bf16.gmra.mrb[0].mxu0 %v150
    %v186 = vpop.f32.mrb[0].mxu0
    %v187 = vadd.f32 0.0, %v186
    %v188 = vpop.f32.mrb[0].mxu0
    %v189 = vpop.f32.mrb[0].mxu0
    %v190 = vadd.f32 0.0, %v189
    %v191 = vpop.f32.mrb[0].mxu0
    %192 = vdwg.mxu0
    %p193 = scmp.eq.s32.totalorder 0, 0
    // Predicated region
    $region22: #{phi_mlp.1} parent=1 // pred_check
      %p194 = pneg %p193
    $region23: #{phi_mlp.1} parent=1 // pred_check_branch
      %196 = sbr.rel (%p194) target = $region25
    $region24: #{phi_mlp.1} parent=1 // pred_region
      %v197 = vld [vmem:[%s4] sm:$0x1]
      %v199 = vlaneseq
      %v200 = vshrl.u32 %v199, 7
      %v201 = vsub.s32 0, %v200
      %v202 = vrot.slane %v197, %v201
      %v204 = vadd.f32 %v187, %v202
      %v205 = vadd.f32 %v190, %v202
      %206 = vst.msk [vmem:[#allocation2] sm:$0xff] %vm52, %v204
      %207 = vst.msk [vmem:[#allocation2 + $0x8] sm:$0xff] %vm52, %v205
    $region25: #{phi_mlp.1} parent=1 // pred_fallthru
      _
    %p208 = scmp.gt.s32.totalorder 0, 0
    // Predicated region
    $region26: #{phi_mlp.1} parent=1 // pred_check
      %p209 = pneg %p208
    $region27: #{phi_mlp.1} parent=1 // pred_check_branch
      %211 = sbr.rel (%p209) target = $region29
    $region28: #{phi_mlp.1} parent=1 // pred_region
      %v212 = vld [vmem:[#allocation2] sm:$0xff]
      %v213 = vld [vmem:[#allocation2 + $0x8] sm:$0xff]
      %v214 = vadd.f32 %v212, %v187
      %v215 = vadd.f32 %v213, %v190
      %216 = vst.msk [vmem:[#allocation2] sm:$0xff] %vm52, %v214
      %217 = vst.msk [vmem:[#allocation2 + $0x8] sm:$0xff] %vm52, %v215
    $region29: #{phi_mlp.1} parent=1 // pred_fallthru
      _
    // Predicated region
    $region30: #{phi_mlp.1} parent=1 // pred_check
      _
    $region31: #{phi_mlp.1} parent=1 // pred_check_branch
      %219 = sbr.rel (0) target = $region33
    $region32: #{phi_mlp.1} parent=1 // pred_region
      %s221 = ssub.s32 256, 256
      %222 = vsyncadd [#allocation3], %s221
      %s223 = sshll.u32 [#allocation2], 4
      %s224 = int_to_ptr.vmem [resolvable:$true] %s223
      %229 = dma.vmem_to_hbm [thread:$0]  %s224, 256, %s5, [#allocation3], 128, 128, 8
    $region33: #{phi_mlp.1} parent=1 // pred_fallthru
      _
    // Predicated region
    $region34: #{phi_mlp.1} parent=1 // pred_check
      _
    $region35: #{phi_mlp.1} parent=1 // pred_check_branch
      %231 = sbr.rel (0) target = $region37
    $region36: #{phi_mlp.1} parent=1 // pred_region
      %232 = dma.done [#allocation3], 256
    $region37: #{phi_mlp.1} parent=1 // pred_fallthru
      _
    %233 = vsyncpa [#allocation3], 1

</llo_original>
